<compile_context>
chip_gen: v5e
topology: v5e:2x2
jax: 0.10.0
libtpu: 0.0.40
codegen_flags: <defaults>
</compile_context>

<pallas_src>
import jax
import jax.numpy as jnp
from jax.experimental import pallas as pl
from jax.experimental.pallas import tpu as pltpu


def _round_up(x, m):
    return (x + m - 1) // m * m


def padded_node_size(n):
    # +1 guarantees a spare node slot inside the 128-pad for the bias "ones" column.
    return _round_up(n + 1, 128)


# ----------------------------- Pallas kernel ------------------------------- #

def _gated_diffusion_kernel(gwt_ref, wc_ref, xt_ref, o_ref):
    """One grid step = `bb` batch samples, whole node dim, whole horizon.

    Transposed layout (L on sublanes, nodes on lanes):
      gwt_ref: (Np, Np)        bf16  gate_weight^T (batch-shared, constant block)
      wc_ref:  (bb, Np, 2*Np)  bf16  [reaction^T | diffusion^T]; row N of each half
                                     holds the bias (picked up by x^T's ones column)
      xt_ref:  (bb, Lp, Np)    f32   input^T, column N == 1.0
      o_ref:   (bb, Lp, Np)    f32   output^T
    """
    bb, lp, npad = xt_ref.shape
    xt = xt_ref[...]                                     # f32; also the residual

    # Gate: batch-shared weight -> single MXU pass with M = bb*Lp.
    xt_flat_bf = xt.reshape(bb * lp, npad).astype(jnp.bfloat16)
    gate = jnp.dot(xt_flat_bf, gwt_ref[...],
                   preferred_element_type=jnp.float32).reshape(bb, lp, npad)

    # Reaction | diffusion: one batched MXU pass against the stacked weights.
    # Biases ride along in row N of wc (multiplied by xt[:, :, N] == 1).
    xt_bf = xt.astype(jnp.bfloat16)
    rd = jnp.einsum('blv,bvw->blw', xt_bf, wc_ref[...],
                    preferred_element_type=jnp.float32)   # (bb, Lp, 2*Np)
    reaction = rd[:, :, :npad]
    diffusion = rd[:, :, npad:]

    gated = jnp.tanh(gate) * reaction
    sig = 0.5 * (jnp.tanh(0.5 * gated) + 1.0)             # stable sigmoid, one EUP op
    o_ref[...] = sig + diffusion + xt                     # residual add; lane-dense store


def _pick_block_b(b, cap=8):
    """Largest divisor of b that is <= cap and leaves >= 2 grid steps (v7x: 2 TCs)."""
    if b <= 1:
        return 1
    cap = min(cap, max(1, b // 2))
    bb = 1
    for d in range(1, cap + 1):
        if b % d == 0:
            bb = d
    return bb


def gated_diffusion_forward(x, gate_w, react_w, diff_w, react_b, diff_b, *, block_b=None):
    """Forward of gated_diffusion_diffusion_gcn (has_self_loop=False path).

    x:       (B, N, L) float32       = inputs[:, 0, :, :]
    gate_w:  (Nw, Nw)                dense gate weight, Nw in {N, padded_node_size(N)}
    react_w: (B, Nw, Nw)             dense reaction weight per sample
    diff_w:  (B, Nw, Nw)             dense diffusion weight per sample
    react_b: (B, N)
    diff_b:  (B, N)
    returns  (B, N, L)
    """
    B, N, L = x.shape
    Np = padded_node_size(N)
    Lp = _round_up(max(L, 1), 8)

    Nw = gate_w.shape[-1]
    if Nw != Np:                      # weights may already be built at padded size
        dp = Np - Nw
        gate_w = jnp.pad(gate_w, ((0, dp), (0, dp)))
        react_w = jnp.pad(react_w, ((0, 0), (0, dp), (0, dp)))
        diff_w = jnp.pad(diff_w, ((0, 0), (0, dp), (0, dp)))

    # Transposed weights (out^T = x^T @ W^T), biases folded into row N, reaction and
    # diffusion stacked along the output-lane axis, cast to bf16 (f32 accumulation).
    gwt = gate_w.T.astype(jnp.bfloat16)                              # (Np, Np)
    rwt = jnp.swapaxes(react_w, -1, -2).at[:, N, :N].set(react_b)    # (B, Np, Np)
    dwt = jnp.swapaxes(diff_w, -1, -2).at[:, N, :N].set(diff_b)
    wc = jnp.concatenate([rwt, dwt], axis=-1).astype(jnp.bfloat16)   # (B, Np, 2*Np)

    # Transposed, node-lane-padded input; column N carries the bias "ones".
    xt = jnp.zeros((B, Lp, Np), jnp.float32)
    xt = xt.at[:, :L, :N].set(jnp.swapaxes(x, 1, 2))
    xt = xt.at[:, :, N].set(1.0)

    bb = _pick_block_b(B) if block_b is None else block_b
    assert B % bb == 0
    grid = (B // bb,)

    # Per-step VMEM footprint: double-buffered blocked operands + the shared gate weight.
    step_bytes = bb * Np * (2 * Np) * 2 + 2 * bb * Lp * Np * 4
    vmem_limit = int(min(max(2 * step_bytes + Np * Np * 2 + (2 << 20),
                             16 * 1024 * 1024),
                         48 * 1024 * 1024))

    out_t = pl.pallas_call(
        _gated_diffusion_kernel,
        out_shape=jax.ShapeDtypeStruct((B, Lp, Np), jnp.float32),
        grid=grid,
        in_specs=[
            pl.BlockSpec((Np, Np), lambda g: (0, 0)),             # gwt: constant -> one DMA
            pl.BlockSpec((bb, Np, 2 * Np), lambda g: (g, 0, 0)),  # stacked per-sample weights
            pl.BlockSpec((bb, Lp, Np), lambda g: (g, 0, 0)),      # x^T (+ ones column)
        ],
        out_specs=pl.BlockSpec((bb, Lp, Np), lambda g: (g, 0, 0)),
        compiler_params=pltpu.CompilerParams(
            dimension_semantics=("parallel",),
            vmem_limit_bytes=vmem_limit),
    )(gwt, wc, xt)

    return jnp.swapaxes(out_t[:, :L, :N], 1, 2)


# --------------- wrapper-side dense weight construction (plain JAX) --------------- #

def build_gate_weight(rows, cols, gate_edge_vals, gate_node_vals, n, n_pad=None):
    # torch.sparse_coo_tensor(...).to_dense() + torch.diag(gate_weight_node),
    # built directly at the padded node size (padding entries stay exactly zero).
    n_pad = n if n_pad is None else n_pad
    a = jnp.zeros((n_pad, n_pad), jnp.float32).at[rows, cols].add(gate_edge_vals)
    return a.at[jnp.arange(n), jnp.arange(n)].add(gate_node_vals)


def build_laplacian_weights(rows, cols, edge_vals, n, n_pad=None):
    # Mirrors:  A = to_dense(coo);  I = diag(sum(A, dim=1 of (1,N,N))) = diag(col-sums);  W = I - A
    n_pad = n if n_pad is None else n_pad

    def one(v):
        a = jnp.zeros((n_pad, n_pad), jnp.float32).at[rows, cols].add(v)
        return jnp.diag(a.sum(axis=0)) - a

    return jax.vmap(one)(edge_vals)


# ----------------------------------- demo ----------------------------------- #

if __name__ == "__main__":
    # Small shapes consistent with the module (real model: node_size=207, 288/resolution slots).
    num_node = 64
    num_edge = 96
    batch = 4
    seq_len = 16          # trailing 'l' axis of the (n, v, l) input
    num_slots = 12        # stands in for int(288 / resolution)
    resolution = 1
    symetric = True       # symmetric edge weights (default module config)
    # has_self_loop = False -> gated path implemented by the kernel

    key = jax.random.PRNGKey(0)
    ks = jax.random.split(key, 8)

    edge_from = jax.random.randint(ks[0], (num_edge,), 0, num_node)
    edge_to = jax.random.randint(ks[1], (num_edge,), 0, num_node)

    weight_react = jax.random.normal(ks[2], (num_slots, num_edge), jnp.float32) / 10.0
    weight_diff = jax.random.normal(ks[3], (num_slots, num_edge), jnp.float32) / 1000.0
    bias_reaction = jax.random.normal(ks[4], (num_slots, num_node), jnp.float32) / 10.0
    bias_diffusion = jax.random.normal(ks[5], (num_slots, num_node), jnp.float32) / 10.0
    gate_weight_edge = jax.random.normal(ks[6], (num_edge,), jnp.float32)
    gate_weight_node = jax.random.normal(ks[7], (num_node,), jnp.float32)

    inputs = jax.random.normal(jax.random.PRNGKey(1),
                               (batch, 2, num_node, seq_len), jnp.float32)
    ind = jnp.array([1, 4, 7, 11], dtype=jnp.int32)   # time-of-day index per sample

    # --- construct dense weights exactly as the PyTorch module does (wrapper-side) ---
    ii = (ind // resolution).astype(jnp.int32)
    assert symetric
    rows = jnp.concatenate([edge_from, edge_to])
    cols = jnp.concatenate([edge_to, edge_from])
    react_vals = jnp.concatenate([weight_react[ii], weight_react[ii]], axis=1)
    diff_vals = jnp.concatenate([weight_diff[ii], weight_diff[ii]], axis=1)
    gate_edge_vals = jnp.concatenate([gate_weight_edge, gate_weight_edge])

    n_pad = padded_node_size(num_node)   # build directly at padded size (no pad copy later)
    gate_w = build_gate_weight(rows, cols, gate_edge_vals, gate_weight_node,
                               num_node, n_pad)
    react_w = build_laplacian_weights(rows, cols, react_vals, num_node, n_pad)
    diff_w = build_laplacian_weights(rows, cols, diff_vals, num_node, n_pad)
    react_b = bias_reaction[ii]
    diff_b = bias_diffusion[ii]

    x = inputs[:, 0, :, :]

    out = gated_diffusion_forward(x, gate_w, react_w, diff_w, react_b, diff_b)
    out = jax.block_until_ready(out)

    # Pure-JAX reference of the same forward at HIGHEST precision (unpadded weights).
    hp = jax.lax.Precision.HIGHEST
    gw_d = gate_w[:num_node, :num_node]
    rw_d = react_w[:, :num_node, :num_node]
    dw_d = diff_w[:, :num_node, :num_node]
    gate = jnp.einsum('wv,nvl->nwl', gw_d, x, precision=hp)
    reaction = jnp.einsum('nwv,nvl->nwl', rw_d, x, precision=hp) + react_b[:, :, None]
    diffusion = jnp.einsum('nwv,nvl->nwl', dw_d, x, precision=hp) + diff_b[:, :, None]
    ref = jax.nn.sigmoid(jnp.tanh(gate) * reaction) + diffusion + x

    assert out.shape == x.shape
    # Tolerance accommodates the explicit bf16 weight/activation MXU passes (f32 accumulate).
    max_abs_diff = float(jnp.max(jnp.abs(out - ref)))
    assert jnp.allclose(out, ref, atol=3e-2, rtol=3e-2), max_abs_diff

    print("KERNEL_OK")
</pallas_src>

<mosaic_0001>
module attributes {stable_mosaic.version = 11 : i64} {
  func.func @_gated_diffusion_kernel(%arg0: i32, %arg1: memref<128x128xbf16, #tpu.memory_space<vmem>>, %arg2: memref<2x128x256xbf16, #tpu.memory_space<vmem>>, %arg3: memref<2x16x128xf32, #tpu.memory_space<vmem>>, %arg4: memref<2x16x128xf32, #tpu.memory_space<vmem>>) attributes {dimension_semantics = [#tpu.dimension_semantics<parallel>], iteration_bounds = array<i64: 2>, scalar_prefetch = 0 : i64, scratch_operands = 0 : i64, tpu.core_type = #tpu.core_type<tc>, window_params = [{pipeline_mode = #tpu.pipeline_mode<synchronous>, transform_indices = @transform_0, window_bounds = array<i64: 128, 128>}, {transform_indices = @transform_1, window_bounds = array<i64: 2, 128, 256>}, {transform_indices = @transform_2, window_bounds = array<i64: 2, 16, 128>}, {transform_indices = @transform_3, window_bounds = array<i64: 2, 16, 128>}]} {
    %c0 = arith.constant 0 : index
    %c0_0 = arith.constant 0 : index
    %c0_1 = arith.constant 0 : index
    %0 = vector.load %arg3[%c0, %c0_0, %c0_1] : memref<2x16x128xf32, #tpu.memory_space<vmem>>, vector<2x16x128xf32>
    %1 = vector.shape_cast %0 : vector<2x16x128xf32> to vector<32x128xf32>
    %2 = arith.truncf %1 : vector<32x128xf32> to vector<32x128xbf16>
    %c0_2 = arith.constant 0 : index
    %c0_3 = arith.constant 0 : index
    %3 = vector.load %arg1[%c0_2, %c0_3] : memref<128x128xbf16, #tpu.memory_space<vmem>>, vector<128x128xbf16>
    %cst = arith.constant dense<0.000000e+00> : vector<32x128xf32>
    %4 = tpu.matmul %2, %3, %cst {dimension_numbers = #tpu.dot_dimension_numbers<[1], [0], [0], [1], [0, 0, 1, 1], [], []>} : vector<32x128xbf16>, vector<128x128xbf16>, vector<32x128xf32> -> vector<32x128xf32>
    %5 = vector.shape_cast %4 : vector<32x128xf32> to vector<2x16x128xf32>
    %6 = arith.truncf %0 : vector<2x16x128xf32> to vector<2x16x128xbf16>
    %c0_4 = arith.constant 0 : index
    %c0_5 = arith.constant 0 : index
    %c0_6 = arith.constant 0 : index
    %7 = vector.load %arg2[%c0_4, %c0_5, %c0_6] : memref<2x128x256xbf16, #tpu.memory_space<vmem>>, vector<2x128x256xbf16>
    "tpu.trace_start"() <{level = 10 : i32, message = "blv,bvw->blw"}> : () -> ()
    %cst_7 = arith.constant dense<0.000000e+00> : vector<2x16x256xf32>
    %8 = tpu.matmul %6, %7, %cst_7 {dimension_numbers = #tpu.dot_dimension_numbers<[2], [1], [1], [2], [0, 0, 0, 1, 1, 2], [0], [0]>} : vector<2x16x128xbf16>, vector<2x128x256xbf16>, vector<2x16x256xf32> -> vector<2x16x256xf32>
    "tpu.trace_stop"() : () -> ()
    %9 = vector.extract_strided_slice %8 {offsets = [0, 0, 0], sizes = [2, 16, 128], strides = [1, 1, 1]} : vector<2x16x256xf32> to vector<2x16x128xf32>
    %10 = vector.extract_strided_slice %8 {offsets = [0, 0, 128], sizes = [2, 16, 128], strides = [1, 1, 1]} : vector<2x16x256xf32> to vector<2x16x128xf32>
    %11 = math.tanh %5 : vector<2x16x128xf32>
    %12 = arith.mulf %11, %9 : vector<2x16x128xf32>
    %cst_8 = arith.constant 5.000000e-01 : f32
    %13 = vector.broadcast %cst_8 : f32 to vector<2x16x128xf32>
    %14 = arith.mulf %13, %12 : vector<2x16x128xf32>
    %15 = math.tanh %14 : vector<2x16x128xf32>
    %cst_9 = arith.constant 1.000000e+00 : f32
    %16 = vector.broadcast %cst_9 : f32 to vector<2x16x128xf32>
    %17 = arith.addf %15, %16 : vector<2x16x128xf32>
    %cst_10 = arith.constant 5.000000e-01 : f32
    %18 = vector.broadcast %cst_10 : f32 to vector<2x16x128xf32>
    %19 = arith.mulf %18, %17 : vector<2x16x128xf32>
    %20 = arith.addf %19, %10 : vector<2x16x128xf32>
    %21 = arith.addf %20, %0 : vector<2x16x128xf32>
    %c0_11 = arith.constant 0 : index
    %c0_12 = arith.constant 0 : index
    %c0_13 = arith.constant 0 : index
    %22 = vector.load %arg4[%c0_11, %c0_12, %c0_13] : memref<2x16x128xf32, #tpu.memory_space<vmem>>, vector<2x16x128xf32>
    tpu.vector_store %arg4[%c0_11, %c0_12, %c0_13], %21 {strides = array<i32>} : memref<2x16x128xf32, #tpu.memory_space<vmem>>, vector<2x16x128xf32>,
    return
  }
  func.func @transform_0(%arg0: i32) -> (i32, i32) {
    %c0_i32 = arith.constant 0 : i32
    %c0_i32_0 = arith.constant 0 : i32
    %c0_i32_1 = arith.constant 0 : i32
    return %c0_i32, %c0_i32_0 : i32, i32
  }
  func.func @transform_1(%arg0: i32) -> (i32, i32, i32) {
    %c0_i32 = arith.constant 0 : i32
    %c0_i32_0 = arith.constant 0 : i32
    %c0_i32_1 = arith.constant 0 : i32
    return %arg0, %c0_i32, %c0_i32_0 : i32, i32, i32
  }
  func.func @transform_2(%arg0: i32) -> (i32, i32, i32) {
    %c0_i32 = arith.constant 0 : i32
    %c0_i32_0 = arith.constant 0 : i32
    %c0_i32_1 = arith.constant 0 : i32
    return %arg0, %c0_i32, %c0_i32_0 : i32, i32, i32
  }
  func.func @transform_3(%arg0: i32) -> (i32, i32, i32) {
    %c0_i32 = arith.constant 0 : i32
    %c0_i32_0 = arith.constant 0 : i32
    %c0_i32_1 = arith.constant 0 : i32
    return %arg0, %c0_i32, %c0_i32_0 : i32, i32, i32
  }
}

</mosaic_0001>

<llo_original>
// kernel: tpu_custom_call.1
$region0: #{tpu_custom_call.1}
  #allocation0 [shape = 'u32[]', space=smem, size = 0x4, offset = 0x4, fixed_abs, tag = 'smem constant byte address 0x4 - core index']
  #allocation1 [shape = 'u32[72,128]{1,0:T(1,128)}', space=vmem, size = 0x9000, scoped, tag = 'internal scratch']
  %s0 = inlined_call_operand.hbm [shape: bf16[128,128], index: 0, kind: input, shape index: {}]
  %s1 = inlined_call_operand.hbm [shape: bf16[4,128,256], index: 1, kind: input, shape index: {}]
  %s2 = inlined_call_operand.hbm [shape: f32[4,16,128], index: 2, kind: input, shape index: {}]
  %s3 = inlined_call_operand.hbm [shape: f32[4,16,128], index: 3, kind: output, shape index: {}]
  %s4 = sld [smem:[#allocation0]]
  $region57: #{tpu_custom_call.1} parent=0
    _
  %s6 = ssub.s32 1, %s4
  %s7 = scalar_select 0, %s6, %s4
  $region1: #{tpu_custom_call.1} parent=0
    #allocation2 [shape = 'u8[32768]{0}', space=vmem, size = 0x8000, scoped, tag = 'input window, operand 0, single buffered']
    #allocation3 [shape = 's32[2]{0}', space=sflag, size = 0x8, scoped, tag = 'scoped memory for tpu_custom_call.1']
    #allocation4 [shape = 's32[2]{0}', space=sflag, size = 0x8, scoped, tag = 'scoped memory for tpu_custom_call.1']
    #allocation5 [shape = 'u8[262144]{0}', space=vmem, size = 0x40000, scoped, tag = 'input window, operand 1']
    #allocation6 [shape = 's32[2]{0}', space=sflag, size = 0x8, scoped, tag = 'scoped memory for tpu_custom_call.1']
    #allocation7 [shape = 'u8[32768]{0}', space=vmem, size = 0x8000, scoped, tag = 'input window, operand 2']
    #allocation8 [shape = 'u8[32768]{0}', space=vmem, size = 0x8000, scoped, tag = 'output window, operand 0']
    %8 = vsyncpa [#allocation3], 0
    %9 = vsyncpa [#allocation6], 0
    %s10 = scalar_lea.sflag [#allocation6], 1
    %11 = vsyncpa %s10, 0
    %12 = vsyncpa [#allocation4], 0
    %s13 = scalar_lea.sflag [#allocation4], 1
    %14 = vsyncpa %s13, 0
    loop: start=0, step=1, limit=4
    $region2: #{tpu_custom_call.1} parent=1 // loop_pre_header
      _
    $region3: #{tpu_custom_call.1} parent=1 // loop_header
      %s16 = sphi 0, %s20
      %p17 = scmp.ge.s32.totalorder %s16, 4
      %s24 = sphi 0, %s24
      %s26 = sphi 0, %s24
      %s27 = sphi 0, %s26
      %s41 = sphi 0, %s27
      %s47 = sphi 0, %s49
      %s50 = sphi 0, %s47
      %s51 = sphi 0, %s50
      %s67 = sphi 0, %s51
      %s73 = sphi 0, %s75
      %s76 = sphi 0, %s73
      %s77 = sphi 0, %s76
      %s93 = sphi 0, %s77
      %s99 = sphi 0, %s101
      %s102 = sphi 0, %s99
      %s103 = sphi 0, %s102
      %s119 = sphi 0, %s103
    $region4: #{tpu_custom_call.1} parent=1 // loop_header_branch
      %19 = sbr.rel (%p17) target = $region8
    $region5: #{tpu_custom_call.1} parent=1 // loop_body
      %s21 = ssub.s32 %s16, 1
      %s22 = ssub.s32 %s16, 2
      %s23 = sadd.s32 %s16, 1
      %s25 = sadd.s32 %s24, 1
      %p28 = scmp.eq.s32.totalorder %s16, 1
      %p29 = scmp.ne.s32.totalorder %s24, %s26
      %p30 = scmp.eq.s32.totalorder %s16, 0
      %p31 = por %p29, %p30
      %p32 = scmp.ne.s32.totalorder %s24, %s26
      %p33 = scmp.eq.s32.totalorder %s21, 1
      %p34 = por %p32, %p33
      %p35 = scmp.ne.s32.totalorder %s26, %s27
      %p36 = scmp.eq.s32.totalorder %s21, 0
      %p37 = por %p35, %p36
      %p38 = scmp.ne.s32.totalorder %s26, %s27
      %p39 = scmp.eq.s32.totalorder %s22, 1
      %p40 = por %p38, %p39
      %p42 = scmp.ne.s32.totalorder %s27, %s41
      %p43 = scmp.eq.s32.totalorder %s22, 0
      %p44 = por %p42, %p43
      %s45 = ssub.s32 %s16, %s23
      %p46 = scmp.eq.s32.totalorder %s45, 0
      %s48 = sadd.s32 %s47, 1
      %s49 = scalar_select %p46, %s47, %s48
      %p52 = pneg %p46
      %p53 = scmp.eq.s32.totalorder %s16, 1
      %p54 = por %p52, %p53
      %p55 = scmp.ne.s32.totalorder %s47, %s50
      %p56 = scmp.eq.s32.totalorder %s16, 0
      %p57 = por %p55, %p56
      %p58 = scmp.ne.s32.totalorder %s47, %s50
      %p59 = scmp.eq.s32.totalorder %s21, 1
      %p60 = por %p58, %p59
      %p61 = scmp.ne.s32.totalorder %s50, %s51
      %p62 = scmp.eq.s32.totalorder %s21, 0
      %p63 = por %p61, %p62
      %p64 = scmp.ne.s32.totalorder %s50, %s51
      %p65 = scmp.eq.s32.totalorder %s22, 1
      %p66 = por %p64, %p65
      %p68 = scmp.ne.s32.totalorder %s51, %s67
      %p69 = scmp.eq.s32.totalorder %s22, 0
      %p70 = por %p68, %p69
      %s71 = ssub.s32 %s16, %s23
      %p72 = scmp.eq.s32.totalorder %s71, 0
      %s74 = sadd.s32 %s73, 1
      %s75 = scalar_select %p72, %s73, %s74
      %p78 = pneg %p72
      %p79 = scmp.eq.s32.totalorder %s16, 1
      %p80 = por %p78, %p79
      %p81 = scmp.ne.s32.totalorder %s73, %s76
      %p82 = scmp.eq.s32.totalorder %s16, 0
      %p83 = por %p81, %p82
      %p84 = scmp.ne.s32.totalorder %s73, %s76
      %p85 = scmp.eq.s32.totalorder %s21, 1
      %p86 = por %p84, %p85
      %p87 = scmp.ne.s32.totalorder %s76, %s77
      %p88 = scmp.eq.s32.totalorder %s21, 0
      %p89 = por %p87, %p88
      %p90 = scmp.ne.s32.totalorder %s76, %s77
      %p91 = scmp.eq.s32.totalorder %s22, 1
      %p92 = por %p90, %p91
      %p94 = scmp.ne.s32.totalorder %s77, %s93
      %p95 = scmp.eq.s32.totalorder %s22, 0
      %p96 = por %p94, %p95
      %s97 = ssub.s32 %s16, %s23
      %p98 = scmp.eq.s32.totalorder %s97, 0
      %s100 = sadd.s32 %s99, 1
      %s101 = scalar_select %p98, %s99, %s100
      %p104 = pneg %p98
      %p105 = scmp.eq.s32.totalorder %s16, 1
      %p106 = por %p104, %p105
      %p107 = scmp.ne.s32.totalorder %s99, %s102
      %p108 = scmp.eq.s32.totalorder %s16, 0
      %p109 = por %p107, %p108
      %p110 = scmp.ne.s32.totalorder %s99, %s102
      %p111 = scmp.eq.s32.totalorder %s21, 1
      %p112 = por %p110, %p111
      %p113 = scmp.ne.s32.totalorder %s102, %s103
      %p114 = scmp.eq.s32.totalorder %s21, 0
      %p115 = por %p113, %p114
      %p116 = scmp.ne.s32.totalorder %s102, %s103
      %p117 = scmp.eq.s32.totalorder %s22, 1
      %p118 = por %p116, %p117
      %p120 = scmp.ne.s32.totalorder %s103, %s119
      %p121 = scmp.eq.s32.totalorder %s22, 0
      %p122 = por %p120, %p121
      %p123 = scmp.le.s32.totalorder 1, %s16
      %p124 = scmp.lt.s32.totalorder %s16, 3
      %p125 = pnand %p123, %p124
      %p126 = pneg %p125
      // Predicated region
      $region9: #{tpu_custom_call.1} parent=5 // pred_check
        _
      $region10: #{tpu_custom_call.1} parent=5 // pred_check_branch
        %128 = sbr.rel (%p125) target = $region12
      $region11: #{tpu_custom_call.1} parent=5 // pred_region
        %s129 = ssub.s32 %s16, 1
        // Predicated region
        $region13: #{tpu_custom_call.1} parent=11 // pred_check
          %p130 = pneg %p37
        $region14: #{tpu_custom_call.1} parent=11 // pred_check_branch
          %132 = sbr.rel (%p130) target = $region16
        $region15: #{tpu_custom_call.1} parent=11 // pred_region
          %134 = vsyncadd [#allocation3], 0
          %s135 = sshll.u32 %s0, 4
          %s136 = int_to_ptr.hbm [resolvable:$true] %s135
          %s137 = sshll.u32 [#allocation2], 4
          %s138 = int_to_ptr.vmem [resolvable:$true] %s137
          %143 = dma.hbm_to_vmem [thread:$0]  %s136, 1024, %s138, [#allocation3], 64, 64, 4
        $region16: #{tpu_custom_call.1} parent=11 // pred_fallthru
          _
      $region12: #{tpu_custom_call.1} parent=5 // pred_fallthru
        _
      %p144 = scmp.lt.s32.totalorder %s16, 2
      // Predicated region
      $region17: #{tpu_custom_call.1} parent=5 // pred_check
        %p145 = pneg %p144
      $region18: #{tpu_custom_call.1} parent=5 // pred_check_branch
        %147 = sbr.rel (%p145) target = $region20
      $region19: #{tpu_custom_call.1} parent=5 // pred_region
        // Predicated region
        $region21: #{tpu_custom_call.1} parent=19 // pred_check
          %p148 = pneg %p57
        $region22: #{tpu_custom_call.1} parent=19 // pred_check_branch
          %150 = sbr.rel (%p148) target = $region24
        $region23: #{tpu_custom_call.1} parent=19 // pred_region
          %s151 = sand.u32 %s16, 1
          %s152 = scalar_lea.sflag [#allocation6], %s151
          %s153 = sand.u32 %s47, 1
          %s154 = smul.addr %s153, 256
          %s155 = scalar_lea.vmem [#allocation5], %s154
          %s156 = smul.u32 2, %s16
          %158 = vsyncadd %s152, 0
          %s159 = smul.addr %s156, 32
          %s160 = smul.addr %s159, 4
          %s161 = scalar_lea.hbm %s1, %s160
          %s162 = sshll.u32 %s161, 4
          %s163 = int_to_ptr.hbm [resolvable:$true] %s162
          %s164 = sshll.u32 %s155, 4
          %s165 = int_to_ptr.vmem [resolvable:$true] %s164
          %170 = dma.hbm_to_vmem [thread:$0]  %s163, 4096, %s165, %s152, 128, 128, 8
        $region24: #{tpu_custom_call.1} parent=19 // pred_fallthru
          _
        // Predicated region
        $region25: #{tpu_custom_call.1} parent=19 // pred_check
          %p171 = pneg %p83
        $region26: #{tpu_custom_call.1} parent=19 // pred_check_branch
          %173 = sbr.rel (%p171) target = $region28
        $region27: #{tpu_custom_call.1} parent=19 // pred_region
          %s174 = sand.u32 %s16, 1
          %s175 = scalar_lea.sflag [#allocation6], %s174
          %s176 = sand.u32 %s73, 1
          %s177 = smul.addr %s176, 32
          %s178 = scalar_lea.vmem [#allocation7], %s177
          %s179 = smul.u32 2, %s16
          %181 = vsyncadd %s175, 0
          %s182 = smul.addr %s179, 2
          %s183 = smul.addr %s182, 8
          %s184 = scalar_lea.hbm %s2, %s183
          %s185 = sshll.u32 %s184, 4
          %s186 = int_to_ptr.hbm [resolvable:$true] %s185
          %s187 = sshll.u32 %s178, 4
          %s188 = int_to_ptr.vmem [resolvable:$true] %s187
          %193 = dma.hbm_to_vmem [thread:$0]  %s186, 512, %s188, %s175, 128, 128, 8
        $region28: #{tpu_custom_call.1} parent=19 // pred_fallthru
          _
      $region20: #{tpu_custom_call.1} parent=5 // pred_fallthru
        _
      %p194 = scmp.le.s32.totalorder 1, %s16
      %p195 = scmp.lt.s32.totalorder %s16, 3
      %p196 = pnand %p194, %p195
      %p197 = pneg %p196
      // Predicated region
      $region29: #{tpu_custom_call.1} parent=5 // pred_check
        _
      $region30: #{tpu_custom_call.1} parent=5 // pred_check_branch
        %199 = sbr.rel (%p196) target = $region32
      $region31: #{tpu_custom_call.1} parent=5 // pred_region
        %s200 = ssub.s32 %s16, 1
        // Predicated region
        $region33: #{tpu_custom_call.1} parent=31 // pred_check
          %p201 = pneg %p37
        $region34: #{tpu_custom_call.1} parent=31 // pred_check_branch
          %203 = sbr.rel (%p201) target = $region36
        $region35: #{tpu_custom_call.1} parent=31 // pred_region
          %205 = dma.done [#allocation3], 1024
        $region36: #{tpu_custom_call.1} parent=31 // pred_fallthru
          _
        %s206 = sand.u32 %s21, 1
        %s207 = scalar_lea.sflag [#allocation6], %s206
        %s208 = sand.u32 %s50, 1
        %s209 = smul.addr %s208, 256
        %s210 = scalar_lea.vmem [#allocation5], %s209
        // Predicated region
        $region37: #{tpu_custom_call.1} parent=31 // pred_check
          %p211 = pneg %p63
        $region38: #{tpu_custom_call.1} parent=31 // pred_check_branch
          %213 = sbr.rel (%p211) target = $region40
        $region39: #{tpu_custom_call.1} parent=31 // pred_region
          %215 = dma.done %s207, 4096
        $region40: #{tpu_custom_call.1} parent=31 // pred_fallthru
          _
        %s216 = sand.u32 %s21, 1
        %s217 = scalar_lea.sflag [#allocation6], %s216
        %s218 = sand.u32 %s76, 1
        %s219 = smul.addr %s218, 32
        %s220 = scalar_lea.vmem [#allocation7], %s219
        // Predicated region
        $region41: #{tpu_custom_call.1} parent=31 // pred_check
          %p221 = pneg %p89
        $region42: #{tpu_custom_call.1} parent=31 // pred_check_branch
          %223 = sbr.rel (%p221) target = $region44
        $region43: #{tpu_custom_call.1} parent=31 // pred_region
          %225 = dma.done %s217, 512
        $region44: #{tpu_custom_call.1} parent=31 // pred_fallthru
          _
        %p226 = pneg %p37
        %p227 = pneg %p34
        %s228 = sand.u32 %s21, 1
        %s229 = scalar_lea.sflag [#allocation6], %s228
        %s230 = sand.u32 %s50, 1
        %s231 = smul.addr %s230, 256
        %s232 = scalar_lea.vmem [#allocation5], %s231
        %p233 = pneg %p63
        %p234 = pneg %p60
        %s235 = sand.u32 %s21, 1
        %s236 = scalar_lea.sflag [#allocation6], %s235
        %s237 = sand.u32 %s76, 1
        %s238 = smul.addr %s237, 32
        %s239 = scalar_lea.vmem [#allocation7], %s238
        %p240 = pneg %p89
        %p241 = pneg %p86
        %p242 = pneg %p115
        %p243 = pneg %p112
        %s244 = sand.u32 %s102, 1
        %s245 = scalar_lea.sflag [#allocation4], %s244
        %s246 = sand.u32 %s102, 1
        %s247 = smul.addr %s246, 32
        %s248 = scalar_lea.vmem [#allocation8], %s247
        %s249 = smul.u32 2, %s21
        %s250 = smul.u32 2, %s21
        %s251 = smul.u32 2, %s21
        %v252 = vld [vmem:[%s220] sm:$0xff]
        %v253 = vld [vmem:[%s220 + $0x8] sm:$0xff]
        %v254 = vld [vmem:[%s220 + $0x10] sm:$0xff]
        %v255 = vld [vmem:[%s220 + $0x18] sm:$0xff]
        %v256 = vpack.c.bf16 %v253, %v252
        %v257 = vpack.c.bf16 %v255, %v254
        %v258 = vld [vmem:[#allocation2] sm:$0xf]
        %v259 = vld [vmem:[#allocation2 + $0x4] sm:$0xf]
        %v260 = vld [vmem:[#allocation2 + $0x8] sm:$0xf]
        %v261 = vld [vmem:[#allocation2 + $0xc] sm:$0xf]
        %v262 = vld [vmem:[#allocation2 + $0x10] sm:$0xf]
        %v263 = vld [vmem:[#allocation2 + $0x14] sm:$0xf]
        %v264 = vld [vmem:[#allocation2 + $0x18] sm:$0xf]
        %v265 = vld [vmem:[#allocation2 + $0x1c] sm:$0xf]
        %v266 = vld [vmem:[#allocation2 + $0x20] sm:$0xf]
        %v267 = vld [vmem:[#allocation2 + $0x24] sm:$0xf]
        %v268 = vld [vmem:[#allocation2 + $0x28] sm:$0xf]
        %v269 = vld [vmem:[#allocation2 + $0x2c] sm:$0xf]
        %v270 = vld [vmem:[#allocation2 + $0x30] sm:$0xf]
        %v271 = vld [vmem:[#allocation2 + $0x34] sm:$0xf]
        %v272 = vld [vmem:[#allocation2 + $0x38] sm:$0xf]
        %v273 = vld [vmem:[#allocation2 + $0x3c] sm:$0xf]
        %v290 = vunpack.c.l.b16 %v258
        %v291 = vunpack.c.l.b16 %v259
        %v292 = vunpack.c.l.b16 %v260
        %v293 = vunpack.c.l.b16 %v261
        %v294 = vunpack.c.l.b16 %v262
        %v295 = vunpack.c.l.b16 %v263
        %v296 = vunpack.c.l.b16 %v264
        %v297 = vunpack.c.l.b16 %v265
        %v298 = vunpack.c.l.b16 %v266
        %v299 = vunpack.c.l.b16 %v267
        %v300 = vunpack.c.l.b16 %v268
        %v301 = vunpack.c.l.b16 %v269
        %v302 = vunpack.c.l.b16 %v270
        %v303 = vunpack.c.l.b16 %v271
        %v304 = vunpack.c.l.b16 %v272
        %v305 = vunpack.c.l.b16 %v273
        %v306 = vpack.c.b16 %v291, %v290
        %v307 = vpack.c.b16 %v293, %v292
        %v308 = vpack.c.b16 %v295, %v294
        %v309 = vpack.c.b16 %v297, %v296
        %v310 = vpack.c.b16 %v299, %v298
        %v311 = vpack.c.b16 %v301, %v300
        %v312 = vpack.c.b16 %v303, %v302
        %v313 = vpack.c.b16 %v305, %v304
        %322 = vmatpush.bf16.msra.mxu0 %v313
        %323 = vmatpush.bf16.msra.mxu0 %v312
        %324 = vmatpush.bf16.msra.mxu0 %v311
        %325 = vmatpush.bf16.msra.mxu0 %v310
        %326 = vmatpush.bf16.msra.mxu0 %v309
        %327 = vmatpush.bf16.msra.mxu0 %v308
        %328 = vmatpush.bf16.msra.mxu0 %v307
        %329 = vmatpush.bf16.msra.mxu0 %v306
        %330 = vmatmul.bf16.gmra.mxu0 %v256
        %v331 = vpop.f32.mrf.mxu0
        %v332 = vadd.f32 0.0, %v331
        %v333 = vpop.f32.mrf.mxu0
        %v334 = vadd.f32 0.0, %v333
        %335 = vmatmul.bf16.gmra.mxu0 %v257
        %v336 = vpop.f32.mrf.mxu0
        %v337 = vadd.f32 0.0, %v336
        %v338 = vpop.f32.mrf.mxu0
        %v339 = vadd.f32 0.0, %v338
        %340 = vdwg.mxu0
        %v341 = vpack.c.bf16 %v252, %v252
        %v342 = vpack.c.bf16 %v253, %v253
        %v343 = vpack.c.bf16 %v254, %v254
        %v344 = vpack.c.bf16 %v255, %v255
        %v345 = vld [vmem:[%s210] sm:$0xff]
        %v346 = vld [vmem:[%s210 + $0x8] sm:$0xff]
        %v347 = vld [vmem:[%s210 + $0x10] sm:$0xff]
        %v348 = vld [vmem:[%s210 + $0x18] sm:$0xff]
        %v349 = vld [vmem:[%s210 + $0x20] sm:$0xff]
        %v350 = vld [vmem:[%s210 + $0x28] sm:$0xff]
        %v351 = vld [vmem:[%s210 + $0x30] sm:$0xff]
        %v352 = vld [vmem:[%s210 + $0x38] sm:$0xff]
        %v353 = vld [vmem:[%s210 + $0x40] sm:$0xff]
        %v354 = vld [vmem:[%s210 + $0x48] sm:$0xff]
        %v355 = vld [vmem:[%s210 + $0x50] sm:$0xff]
        %v356 = vld [vmem:[%s210 + $0x58] sm:$0xff]
        %v357 = vld [vmem:[%s210 + $0x60] sm:$0xff]
        %v358 = vld [vmem:[%s210 + $0x68] sm:$0xff]
        %v359 = vld [vmem:[%s210 + $0x70] sm:$0xff]
        %v360 = vld [vmem:[%s210 + $0x78] sm:$0xff]
        %v361 = vld [vmem:[%s210 + $0x80] sm:$0xff]
        %v362 = vld [vmem:[%s210 + $0x88] sm:$0xff]
        %v363 = vld [vmem:[%s210 + $0x90] sm:$0xff]
        %v364 = vld [vmem:[%s210 + $0x98] sm:$0xff]
        %v365 = vld [vmem:[%s210 + $0xa0] sm:$0xff]
        %v366 = vld [vmem:[%s210 + $0xa8] sm:$0xff]
        %v367 = vld [vmem:[%s210 + $0xb0] sm:$0xff]
        %v368 = vld [vmem:[%s210 + $0xb8] sm:$0xff]
        %v369 = vld [vmem:[%s210 + $0xc0] sm:$0xff]
        %v370 = vld [vmem:[%s210 + $0xc8] sm:$0xff]
        %v371 = vld [vmem:[%s210 + $0xd0] sm:$0xff]
        %v372 = vld [vmem:[%s210 + $0xd8] sm:$0xff]
        %v373 = vld [vmem:[%s210 + $0xe0] sm:$0xff]
        %v374 = vld [vmem:[%s210 + $0xe8] sm:$0xff]
        %v375 = vld [vmem:[%s210 + $0xf0] sm:$0xff]
        %v376 = vld [vmem:[%s210 + $0xf8] sm:$0xff]
        %v379 = vunpack.c.l.b16 %v341
        %v380 = vunpack.c.l.b16 %v342
        %v381 = vpack.c.b16 %v380, %v379
        %v399 = vunpack.c.l.b16 %v345
        %v400 = vunpack.c.h.b16 %v345
        %v401 = vunpack.c.l.b16 %v346
        %v402 = vunpack.c.h.b16 %v346
        %v403 = vunpack.c.l.b16 %v347
        %v404 = vunpack.c.h.b16 %v347
        %v405 = vunpack.c.l.b16 %v348
        %v406 = vunpack.c.h.b16 %v348
        %v407 = vunpack.c.l.b16 %v349
        %v408 = vunpack.c.h.b16 %v349
        %v409 = vunpack.c.l.b16 %v350
        %v410 = vunpack.c.h.b16 %v350
        %v411 = vunpack.c.l.b16 %v351
        %v412 = vunpack.c.h.b16 %v351
        %v413 = vunpack.c.l.b16 %v352
        %v414 = vunpack.c.h.b16 %v352
        %v415 = vunpack.c.l.b16 %v353
        %v416 = vunpack.c.h.b16 %v353
        %v417 = vunpack.c.l.b16 %v354
        %v418 = vunpack.c.h.b16 %v354
        %v419 = vunpack.c.l.b16 %v355
        %v420 = vunpack.c.h.b16 %v355
        %v421 = vunpack.c.l.b16 %v356
        %v422 = vunpack.c.h.b16 %v356
        %v423 = vunpack.c.l.b16 %v357
        %v424 = vunpack.c.h.b16 %v357
        %v425 = vunpack.c.l.b16 %v358
        %v426 = vunpack.c.h.b16 %v358
        %v427 = vunpack.c.l.b16 %v359
        %v428 = vunpack.c.h.b16 %v359
        %v429 = vunpack.c.l.b16 %v360
        %v430 = vunpack.c.h.b16 %v360
        %v431 = vpack.c.b16 %v401, %v399
        %v432 = vpack.c.b16 %v402, %v400
        %v433 = vpack.c.b16 %v405, %v403
        %v434 = vpack.c.b16 %v406, %v404
        %v435 = vpack.c.b16 %v409, %v407
        %v436 = vpack.c.b16 %v410, %v408
        %v437 = vpack.c.b16 %v413, %v411
        %v438 = vpack.c.b16 %v414, %v412
        %v439 = vpack.c.b16 %v417, %v415
        %v440 = vpack.c.b16 %v418, %v416
        %v441 = vpack.c.b16 %v421, %v419
        %v442 = vpack.c.b16 %v422, %v420
        %v443 = vpack.c.b16 %v425, %v423
        %v444 = vpack.c.b16 %v426, %v424
        %v445 = vpack.c.b16 %v429, %v427
        %v446 = vpack.c.b16 %v430, %v428
        %463 = vmatpush.bf16.msra.mxu0 %v445
        %464 = vmatpush.bf16.msra.mxu0 %v443
        %465 = vmatpush.bf16.msra.mxu0 %v441
        %466 = vmatpush.bf16.msra.mxu0 %v439
        %467 = vmatpush.bf16.msra.mxu0 %v437
        %468 = vmatpush.bf16.msra.mxu0 %v435
        %469 = vmatpush.bf16.msra.mxu0 %v433
        %470 = vmatpush.bf16.msra.mxu0 %v431
        %471 = vmatmul.bf16.gmra.mxu0 %v381
        %v472 = vpop.f32.mrf.mxu0
        %v473 = vadd.f32 0.0, %v472
        %v474 = vpop.f32.mrf.mxu0
        %v475 = vadd.f32 0.0, %v474
        %476 = vdwg.mxu0
        %477 = vmatpush.bf16.msra.mxu0 %v446
        %478 = vmatpush.bf16.msra.mxu0 %v444
        %479 = vmatpush.bf16.msra.mxu0 %v442
        %480 = vmatpush.bf16.msra.mxu0 %v440
        %481 = vmatpush.bf16.msra.mxu0 %v438
        %482 = vmatpush.bf16.msra.mxu0 %v436
        %483 = vmatpush.bf16.msra.mxu0 %v434
        %484 = vmatpush.bf16.msra.mxu0 %v432
        %485 = vmatmul.bf16.gmra.mxu0 %v381
        %v486 = vpop.f32.mrf.mxu0
        %v487 = vadd.f32 0.0, %v486
        %v488 = vpop.f32.mrf.mxu0
        %v489 = vadd.f32 0.0, %v488
        %490 = vdwg.mxu0
        %v493 = vunpack.c.l.b16 %v343
        %v494 = vunpack.c.l.b16 %v344
        %v495 = vpack.c.b16 %v494, %v493
        %v513 = vunpack.c.l.b16 %v361
        %v514 = vunpack.c.h.b16 %v361
        %v515 = vunpack.c.l.b16 %v362
        %v516 = vunpack.c.h.b16 %v362
        %v517 = vunpack.c.l.b16 %v363
        %v518 = vunpack.c.h.b16 %v363
        %v519 = vunpack.c.l.b16 %v364
        %v520 = vunpack.c.h.b16 %v364
        %v521 = vunpack.c.l.b16 %v365
        %v522 = vunpack.c.h.b16 %v365
        %v523 = vunpack.c.l.b16 %v366
        %v524 = vunpack.c.h.b16 %v366
        %v525 = vunpack.c.l.b16 %v367
        %v526 = vunpack.c.h.b16 %v367
        %v527 = vunpack.c.l.b16 %v368
        %v528 = vunpack.c.h.b16 %v368
        %v529 = vunpack.c.l.b16 %v369
        %v530 = vunpack.c.h.b16 %v369
        %v531 = vunpack.c.l.b16 %v370
        %v532 = vunpack.c.h.b16 %v370
        %v533 = vunpack.c.l.b16 %v371
        %v534 = vunpack.c.h.b16 %v371
        %v535 = vunpack.c.l.b16 %v372
        %v536 = vunpack.c.h.b16 %v372
        %v537 = vunpack.c.l.b16 %v373
        %v538 = vunpack.c.h.b16 %v373
        %v539 = vunpack.c.l.b16 %v374
        %v540 = vunpack.c.h.b16 %v374
        %v541 = vunpack.c.l.b16 %v375
        %v542 = vunpack.c.h.b16 %v375
        %v543 = vunpack.c.l.b16 %v376
        %v544 = vunpack.c.h.b16 %v376
        %v545 = vpack.c.b16 %v515, %v513
        %v546 = vpack.c.b16 %v516, %v514
        %v547 = vpack.c.b16 %v519, %v517
        %v548 = vpack.c.b16 %v520, %v518
        %v549 = vpack.c.b16 %v523, %v521
        %v550 = vpack.c.b16 %v524, %v522
        %v551 = vpack.c.b16 %v527, %v525
        %v552 = vpack.c.b16 %v528, %v526
        %v553 = vpack.c.b16 %v531, %v529
        %v554 = vpack.c.b16 %v532, %v530
        %v555 = vpack.c.b16 %v535, %v533
        %v556 = vpack.c.b16 %v536, %v534
        %v557 = vpack.c.b16 %v539, %v537
        %v558 = vpack.c.b16 %v540, %v538
        %v559 = vpack.c.b16 %v543, %v541
        %v560 = vpack.c.b16 %v544, %v542
        %577 = vmatpush.bf16.msra.mxu0 %v559
        %578 = vmatpush.bf16.msra.mxu0 %v557
        %579 = vmatpush.bf16.msra.mxu0 %v555
        %580 = vmatpush.bf16.msra.mxu0 %v553
        %581 = vmatpush.bf16.msra.mxu0 %v551
        %582 = vmatpush.bf16.msra.mxu0 %v549
        %583 = vmatpush.bf16.msra.mxu0 %v547
        %584 = vmatpush.bf16.msra.mxu0 %v545
        %585 = vmatmul.bf16.gmra.mxu0 %v495
        %v586 = vpop.f32.mrf.mxu0
        %v587 = vadd.f32 0.0, %v586
        %v588 = vpop.f32.mrf.mxu0
        %v589 = vadd.f32 0.0, %v588
        %590 = vdwg.mxu0
        %591 = vmatpush.bf16.msra.mxu0 %v560
        %592 = vmatpush.bf16.msra.mxu0 %v558
        %593 = vmatpush.bf16.msra.mxu0 %v556
        %594 = vmatpush.bf16.msra.mxu0 %v554
        %595 = vmatpush.bf16.msra.mxu0 %v552
        %596 = vmatpush.bf16.msra.mxu0 %v550
        %597 = vmatpush.bf16.msra.mxu0 %v548
        %598 = vmatpush.bf16.msra.mxu0 %v546
        %599 = vmatmul.bf16.gmra.mxu0 %v495
        %v600 = vpop.f32.mrf.mxu0
        %v601 = vadd.f32 0.0, %v600
        %v602 = vpop.f32.mrf.mxu0
        %v603 = vadd.f32 0.0, %v602
        %604 = vdwg.mxu0
        %v605 = vtanh.pop %v332
        %v606 = vtanh.pop %v334
        %v607 = vtanh.pop %v337
        %v608 = vtanh.pop %v339
        %v609 = vmul.f32 %v605, %v473
        %v610 = vmul.f32 %v606, %v475
        %v611 = vmul.f32 %v607, %v587
        %v612 = vmul.f32 %v608, %v589
        %v613 = vmul.f32 %v609, 0.5
        %v614 = vmul.f32 %v610, 0.5
        %v615 = vmul.f32 %v611, 0.5
        %v616 = vmul.f32 %v612, 0.5
        %v617 = vtanh.pop %v613
        %v618 = vtanh.pop %v614
        %v619 = vtanh.pop %v615
        %v620 = vtanh.pop %v616
        %v621 = vadd.f32 %v617, 1.0
        %v622 = vadd.f32 %v618, 1.0
        %v623 = vadd.f32 %v619, 1.0
        %v624 = vadd.f32 %v620, 1.0
        %v625 = vmul.f32 %v621, 0.5
        %v626 = vmul.f32 %v622, 0.5
        %v627 = vmul.f32 %v623, 0.5
        %v628 = vmul.f32 %v624, 0.5
        %v629 = vadd.f32 %v625, %v487
        %v630 = vadd.f32 %v626, %v489
        %v631 = vadd.f32 %v627, %v601
        %v632 = vadd.f32 %v628, %v603
        %v633 = vadd.f32 %v629, %v252
        %v634 = vadd.f32 %v630, %v253
        %v635 = vadd.f32 %v631, %v254
        %v636 = vadd.f32 %v632, %v255
        %637 = vst [vmem:[%s248] sm:$0xff] %v633
        %638 = vst [vmem:[%s248 + $0x8] sm:$0xff] %v634
        %639 = vst [vmem:[%s248 + $0x10] sm:$0xff] %v635
        %640 = vst [vmem:[%s248 + $0x18] sm:$0xff] %v636
        %s641 = sand.u32 %s102, 1
        %s642 = scalar_lea.sflag [#allocation4], %s641
        %s643 = sand.u32 %s102, 1
        %s644 = smul.addr %s643, 32
        %s645 = scalar_lea.vmem [#allocation8], %s644
        // Predicated region
        $region45: #{tpu_custom_call.1} parent=31 // pred_check
          %p646 = pneg %p112
        $region46: #{tpu_custom_call.1} parent=31 // pred_check_branch
          %648 = sbr.rel (%p646) target = $region48
        $region47: #{tpu_custom_call.1} parent=31 // pred_region
          %s649 = smul.u32 2, %s21
          %651 = vsyncadd %s642, 0
          %s652 = smul.addr %s649, 2
          %s653 = smul.addr %s652, 8
          %s654 = scalar_lea.hbm %s3, %s653
          %s655 = sshll.u32 %s645, 4
          %s656 = int_to_ptr.vmem [resolvable:$true] %s655
          %s657 = sshll.u32 %s654, 4
          %s658 = int_to_ptr.hbm [resolvable:$true] %s657
          %663 = dma.vmem_to_hbm [thread:$0]  %s656, 512, %s658, %s642, 128, 128, 8
        $region48: #{tpu_custom_call.1} parent=31 // pred_fallthru
          _
      $region32: #{tpu_custom_call.1} parent=5 // pred_fallthru
        _
      %p664 = scmp.le.s32.totalorder 2, %s16
      // Predicated region
      $region49: #{tpu_custom_call.1} parent=5 // pred_check
        %p665 = pneg %p664
      $region50: #{tpu_custom_call.1} parent=5 // pred_check_branch
        %667 = sbr.rel (%p665) target = $region52
      $region51: #{tpu_custom_call.1} parent=5 // pred_region
        %s668 = ssub.s32 %s16, 2
        // Predicated region
        $region53: #{tpu_custom_call.1} parent=51 // pred_check
          %p669 = pneg %p118
        $region54: #{tpu_custom_call.1} parent=51 // pred_check_branch
          %671 = sbr.rel (%p669) target = $region56
        $region55: #{tpu_custom_call.1} parent=51 // pred_region
          %s672 = sand.u32 %s103, 1
          %s673 = scalar_lea.sflag [#allocation4], %s672
          %s674 = sand.u32 %s103, 1
          %s675 = smul.addr %s674, 32
          %s676 = scalar_lea.vmem [#allocation8], %s675
          %678 = dma.done %s673, 512
        $region56: #{tpu_custom_call.1} parent=51 // pred_fallthru
          _
      $region52: #{tpu_custom_call.1} parent=5 // pred_fallthru
        _
    $region6: #{tpu_custom_call.1} parent=1 // loop_footer
      %s20 = sadd.s32 1, %s16
    $region7: #{tpu_custom_call.1} parent=1 // loop_footer_branch
      %15 = sbr.rel target = $region3
    $region8: #{tpu_custom_call.1} parent=1 // loop_exit
      _
    %679 = vsyncpa [#allocation3], 1
    %s680 = scalar_lea.sflag [#allocation3], 1
    %681 = vsyncpa %s680, 1
    %682 = vsyncpa [#allocation6], 1
    %s683 = scalar_lea.sflag [#allocation6], 1
    %684 = vsyncpa %s683, 1
    %685 = vsyncpa [#allocation4], 1
    %s686 = scalar_lea.sflag [#allocation4], 1
    %687 = vsyncpa %s686, 1

</llo_original>
